<compile_context>
chip_gen: v5e
topology: v5e:2x2
jax: 0.10.0
libtpu: 0.0.40
codegen_flags: <defaults>
</compile_context>

<pallas_src>
import functools

import jax
import jax.numpy as jnp
from jax.experimental import pallas as pl
from jax.experimental.pallas import tpu as pltpu


def _crossnorm_kernel(hw_true, scalars_ref, x_ref, o_ref):
    """One (R, HW) row tile: per-row instance norm + transfer affine.

    scalars_ref : SMEM (2,) f32 -> [transfer_std, transfer_mean]
    x_ref/o_ref : VMEM (R, HW) tiles (HW is the true spatial extent, so the
                  reductions are exact; any garbage rows in a partial tail
                  block are dropped on writeback).
    """
    x = x_ref[...]
    xf = x.astype(jnp.float32)

    # One-pass statistics: sum and sum of squares (two XLU reductions).
    s1 = jnp.sum(xf, axis=-1, keepdims=True)          # (R, 1)
    s2 = jnp.sum(xf * xf, axis=-1, keepdims=True)     # (R, 1)

    inv_n = jnp.float32(1.0 / hw_true)
    # PyTorch .var() default is unbiased (divide by HW-1); guard HW == 1.
    inv_nm1 = jnp.float32(1.0 / max(hw_true - 1, 1))

    mean = s1 * inv_n                                  # (R, 1)
    var = (s2 - s1 * mean) * inv_nm1                   # (R, 1)
    inv_std = jax.lax.rsqrt(var + jnp.float32(1e-5))   # EUP slot, (R,1) only

    t_std = scalars_ref[0]
    t_mean = scalars_ref[1]

    # Fold normalization + transfer affine into one scale/shift pair so the
    # full tile sees exactly one multiply and one add.
    scale = inv_std * t_std                            # (R, 1) f32
    shift = t_mean - mean * scale                      # (R, 1) f32

    # Multiply the original-dtype tile by the f32 scale (per-vreg promotion);
    # avoids keeping a full f32 copy live for the output path.
    o_ref[...] = (x * scale + shift).astype(o_ref.dtype)


def _round_up(v, m):
    return (v + m - 1) // m * m


def _vmem_budget_bytes():
    try:
        cap = int(pltpu.get_tpu_info().vmem_capacity_bytes)
    except Exception:
        cap = 64 << 20          # conservative fallback: v7x physical VMEM
    return cap // 2             # leave headroom for the runtime


def _choose_row_tile(rows, hw, itemsize, budget):
    """Pick the row-tile size R (sublane-packed, VMEM-safe, grid-friendly)."""
    pack = {4: 8, 2: 16, 1: 32}.get(itemsize, 8)
    # Double-buffered input + output blocks, plus f32 temporaries (xf, xf*xf).
    per_row_vmem = 4 * hw * itemsize + 2 * hw * 4
    r_vmem = max(budget // max(per_row_vmem, 1), pack)
    # ~4 MiB of input per block amortizes the ~0.35 us per-step overhead.
    r_target = max((4 << 20) // max(hw * itemsize, 1), pack)
    r = min(r_vmem, r_target)
    # Keep the grid >= 4 steps when rows allow (pipelining overlap and
    # megacore sharding across v7x's two TensorCores).
    if rows >= 4 * pack:
        r = min(r, rows // 4)
    r = max(pack, (r // pack) * pack)
    if r >= rows:
        r = rows                # full-extent row block: legal for any count
    return r


def crossnorm_forward(x, transfer_std, transfer_mean):
    """x: (N, C, H, W).  transfer_std / transfer_mean: scalar arrays."""
    N, C, H, W = x.shape
    HW = H * W
    rows = N * C
    itemsize = jnp.dtype(x.dtype).itemsize

    budget = _vmem_budget_bytes()
    R = _choose_row_tile(rows, HW, itemsize, budget)
    grid = (pl.cdiv(rows, R),)

    # Contiguous reshape: no data movement, no pad, no trailing slice.
    x_flat = x.reshape(rows, HW)

    scalars = jnp.stack(
        [
            jnp.asarray(transfer_std, jnp.float32).reshape(()),
            jnp.asarray(transfer_mean, jnp.float32).reshape(()),
        ]
    )

    block_bytes = R * HW * itemsize
    f32_temp_bytes = 2 * R * HW * 4
    vmem_needed = 4 * block_bytes + f32_temp_bytes + (2 << 20)
    vmem_limit = int(min(max(vmem_needed, 16 << 20), budget))

    cost = pl.CostEstimate(
        flops=5 * rows * HW,
        transcendentals=rows,
        bytes_accessed=2 * rows * HW * itemsize,
    )

    kernel = functools.partial(_crossnorm_kernel, HW)

    out_flat = pl.pallas_call(
        kernel,
        out_shape=jax.ShapeDtypeStruct((rows, HW), x.dtype),
        grid_spec=pltpu.PrefetchScalarGridSpec(
            num_scalar_prefetch=0,
            grid=grid,
            in_specs=[
                pl.BlockSpec(memory_space=pltpu.MemorySpace.SMEM),  # (2,) scalars
                pl.BlockSpec((R, HW), lambda r: (r, 0)),
            ],
            out_specs=pl.BlockSpec((R, HW), lambda r: (r, 0)),
        ),
        compiler_params=pltpu.CompilerParams(
            dimension_semantics=("parallel",),
            vmem_limit_bytes=vmem_limit,
        ),
        cost_estimate=cost,
    )(scalars, x_flat)

    return out_flat.reshape(N, C, H, W)


def _reference(x, t_std, t_mean):
    """Pure-JAX reference of the PyTorch forward (scalar transfer branch)."""
    N, C, H, W = x.shape
    xf = x.reshape(N, C, -1).astype(jnp.float32)
    mean = jnp.mean(xf, axis=2)
    var = jnp.var(xf, axis=2, ddof=1) + 1e-5
    std = jnp.sqrt(var)
    normalized = (xf - mean[:, :, None]) / std[:, :, None]
    out = normalized * t_std + t_mean
    return out.reshape(N, C, H, W).astype(x.dtype)


if __name__ == "__main__":
    key = jax.random.PRNGKey(0)
    N, C, H, W = 2, 4, 16, 16
    x = jax.random.normal(key, (N, C, H, W), dtype=jnp.float32) * 3.0 + 1.5

    # Parameters mirroring __init__: mean_list entries = 0.0,
    # std_list entries = 1.0; transfer_id = 0.
    nb_target = 3
    mean_list = [jnp.float32(0.0) for _ in range(nb_target)]
    std_list = [jnp.float32(1.0) for _ in range(nb_target)]
    transfer_id = 0

    out = crossnorm_forward(x, std_list[transfer_id], mean_list[transfer_id])
    out = jax.block_until_ready(out)
    ref = _reference(x, std_list[transfer_id], mean_list[transfer_id])
    assert out.shape == (N, C, H, W)
    assert jnp.max(jnp.abs(out - ref)) < 2e-4, "mismatch vs reference"

    # ViT-style non-128-multiple spatial extent (14x14 -> HW=196): exercises
    # the no-pad masked-tail path with a non-trivial transfer affine.
    x2 = jax.random.normal(jax.random.PRNGKey(1), (2, 4, 14, 14),
                           dtype=jnp.float32) * 2.0 - 0.5
    t_std2, t_mean2 = jnp.float32(1.7), jnp.float32(0.3)
    out2 = jax.block_until_ready(crossnorm_forward(x2, t_std2, t_mean2))
    ref2 = _reference(x2, t_std2, t_mean2)
    assert jnp.max(jnp.abs(out2 - ref2)) < 2e-4, "mismatch vs reference (14x14)"

    print("KERNEL_OK")
</pallas_src>

<mosaic_0001>
module attributes {stable_mosaic.version = 11 : i64} {
  func.func @_crossnorm_kernel(%arg0: i32, %arg1: memref<2xf32, #tpu.memory_space<smem>>, %arg2: memref<8x256xf32, #tpu.memory_space<vmem>>, %arg3: memref<8x256xf32, #tpu.memory_space<vmem>>) attributes {dimension_semantics = [#tpu.dimension_semantics<parallel>], iteration_bounds = array<i64: 1>, scalar_prefetch = 0 : i64, scratch_operands = 0 : i64, tpu.core_type = #tpu.core_type<tc>, window_params = [{transform_indices = @transform_0, window_bounds = array<i64: 2>}, {transform_indices = @transform_1, window_bounds = array<i64: 8, 256>}, {transform_indices = @transform_2, window_bounds = array<i64: 8, 256>}]} {
    %c0 = arith.constant 0 : index
    %c0_0 = arith.constant 0 : index
    %0 = vector.load %arg2[%c0, %c0_0] : memref<8x256xf32, #tpu.memory_space<vmem>>, vector<8x256xf32>
    %cst = arith.constant dense<0.000000e+00> : vector<8xf32>
    %1 = vector.multi_reduction <add>, %0, %cst [1] : vector<8x256xf32> to vector<8xf32>
    %2 = vector.shape_cast %1 : vector<8xf32> to vector<8x1xf32>
    %3 = arith.mulf %0, %0 : vector<8x256xf32>
    %cst_1 = arith.constant dense<0.000000e+00> : vector<8xf32>
    %4 = vector.multi_reduction <add>, %3, %cst_1 [1] : vector<8x256xf32> to vector<8xf32>
    %5 = vector.shape_cast %4 : vector<8xf32> to vector<8x1xf32>
    %cst_2 = arith.constant 3.906250e-03 : f32
    %6 = vector.broadcast %cst_2 : f32 to vector<8x1xf32>
    %7 = arith.mulf %2, %6 : vector<8x1xf32>
    %8 = arith.mulf %2, %7 : vector<8x1xf32>
    %9 = arith.subf %5, %8 : vector<8x1xf32>
    %cst_3 = arith.constant 0.00392156886 : f32
    %10 = vector.broadcast %cst_3 : f32 to vector<8x1xf32>
    %11 = arith.mulf %9, %10 : vector<8x1xf32>
    %cst_4 = arith.constant 9.99999974E-6 : f32
    %12 = vector.broadcast %cst_4 : f32 to vector<8x1xf32>
    %13 = arith.addf %11, %12 : vector<8x1xf32>
    %14 = math.rsqrt %13 : vector<8x1xf32>
    %c0_5 = arith.constant 0 : index
    %15 = memref.load %arg1[%c0_5] : memref<2xf32, #tpu.memory_space<smem>>
    %c1 = arith.constant 1 : index
    %16 = memref.load %arg1[%c1] : memref<2xf32, #tpu.memory_space<smem>>
    %17 = vector.broadcast %15 : f32 to vector<8x1xf32>
    %18 = arith.mulf %14, %17 : vector<8x1xf32>
    %19 = arith.mulf %7, %18 : vector<8x1xf32>
    %20 = vector.broadcast %16 : f32 to vector<8x1xf32>
    %21 = arith.subf %20, %19 : vector<8x1xf32>
    %22 = vector.broadcast %18 : vector<8x1xf32> to vector<8x256xf32>
    %23 = arith.mulf %0, %22 : vector<8x256xf32>
    %24 = vector.broadcast %21 : vector<8x1xf32> to vector<8x256xf32>
    %25 = arith.addf %23, %24 : vector<8x256xf32>
    %c0_6 = arith.constant 0 : index
    %c0_7 = arith.constant 0 : index
    %26 = vector.load %arg3[%c0_6, %c0_7] : memref<8x256xf32, #tpu.memory_space<vmem>>, vector<8x256xf32>
    tpu.vector_store %arg3[%c0_6, %c0_7], %25 {strides = array<i32>} : memref<8x256xf32, #tpu.memory_space<vmem>>, vector<8x256xf32>,
    return
  }
  func.func @transform_0(%arg0: i32) -> i32 {
    %c0_i32 = arith.constant 0 : i32
    %c0_i32_0 = arith.constant 0 : i32
    return %c0_i32 : i32
  }
  func.func @transform_1(%arg0: i32) -> (i32, i32) {
    %c0_i32 = arith.constant 0 : i32
    %c0_i32_0 = arith.constant 0 : i32
    return %arg0, %c0_i32 : i32, i32
  }
  func.func @transform_2(%arg0: i32) -> (i32, i32) {
    %c0_i32 = arith.constant 0 : i32
    %c0_i32_0 = arith.constant 0 : i32
    return %arg0, %c0_i32 : i32, i32
  }
}

</mosaic_0001>

<llo_original>
// kernel: tpu_custom_call.1
$region0: #{tpu_custom_call.1}
  #allocation0 [shape = 'u32[]', space=smem, size = 0x4, offset = 0x4, fixed_abs, tag = 'smem constant byte address 0x4 - core index']
  #allocation1 [shape = 'u32[72,128]{1,0:T(1,128)}', space=vmem, size = 0x9000, scoped, tag = 'internal scratch']
  %s0 = inlined_call_operand.hbm [shape: f32[2], index: 0, kind: input, shape index: {}]
  %s1 = inlined_call_operand.hbm [shape: f32[8,256], index: 1, kind: input, shape index: {}]
  %s2 = inlined_call_operand.hbm [shape: f32[8,256], index: 2, kind: output, shape index: {}]
  %s3 = sld [smem:[#allocation0]]
  $region26: #{tpu_custom_call.1} parent=0
    _
  %s5 = ssub.s32 1, %s3
  %s6 = scalar_select 0, %s5, %s3
  $region1: #{tpu_custom_call.1} parent=0
    #allocation2 [shape = 'u8[512]{0}', space=smem, size = 0x200, scoped, tag = 'input window, operand 0, single buffered']
    #allocation3 [shape = 's32[1]{0}', space=sflag, size = 0x4, scoped, tag = 'scoped memory for tpu_custom_call.1']
    #allocation4 [shape = 's32[1]{0}', space=sflag, size = 0x4, scoped, tag = 'scoped memory for tpu_custom_call.1']
    #allocation5 [shape = 's32[1]{0}', space=sflag, size = 0x4, scoped, tag = 'scoped memory for tpu_custom_call.1']
    #allocation6 [shape = 'u8[8192]{0}', space=vmem, size = 0x2000, scoped, tag = 'input window, operand 1, single buffered']
    #allocation7 [shape = 'u8[8192]{0}', space=vmem, size = 0x2000, scoped, tag = 'output window, operand 0, single buffered']
    %7 = vsyncpa [#allocation5], 0
    %8 = vsyncpa [#allocation3], 0
    %9 = vsyncpa [#allocation4], 0
    // Predicated region
    $region2: #{tpu_custom_call.1} parent=1 // pred_check
      _
    $region3: #{tpu_custom_call.1} parent=1 // pred_check_branch
      %11 = sbr.rel (0) target = $region5
    $region4: #{tpu_custom_call.1} parent=1 // pred_region
      %13 = vsyncadd [#allocation5], 0
      %s15 = sshll.u32 %s0, 4
      %s16 = int_to_ptr.hbm [resolvable:$true] %s15
      %18 = dma.hbm_to_smem %s16, 16, [#allocation2], [#allocation5]
    $region5: #{tpu_custom_call.1} parent=1 // pred_fallthru
      _
    // Predicated region
    $region6: #{tpu_custom_call.1} parent=1 // pred_check
      _
    $region7: #{tpu_custom_call.1} parent=1 // pred_check_branch
      %20 = sbr.rel (0) target = $region9
    $region8: #{tpu_custom_call.1} parent=1 // pred_region
      %22 = vsyncadd [#allocation3], 0
      %s24 = sshll.u32 %s1, 4
      %s25 = int_to_ptr.hbm [resolvable:$true] %s24
      %s26 = sshll.u32 [#allocation6], 4
      %s27 = int_to_ptr.vmem [resolvable:$true] %s26
      %29 = dma.hbm_to_vmem [thread:$0]  %s25, 256, %s27, [#allocation3]
    $region9: #{tpu_custom_call.1} parent=1 // pred_fallthru
      _
    // Predicated region
    $region10: #{tpu_custom_call.1} parent=1 // pred_check
      _
    $region11: #{tpu_custom_call.1} parent=1 // pred_check_branch
      %31 = sbr.rel (0) target = $region13
    $region12: #{tpu_custom_call.1} parent=1 // pred_region
      %33 = dma.done [#allocation5], 16
    $region13: #{tpu_custom_call.1} parent=1 // pred_fallthru
      _
    // Predicated region
    $region14: #{tpu_custom_call.1} parent=1 // pred_check
      _
    $region15: #{tpu_custom_call.1} parent=1 // pred_check_branch
      %35 = sbr.rel (0) target = $region17
    $region16: #{tpu_custom_call.1} parent=1 // pred_region
      %37 = dma.done [#allocation3], 256
    $region17: #{tpu_custom_call.1} parent=1 // pred_fallthru
      _
    %38 = sfence
    %v39 = vld [vmem:[#allocation6] sm:$0xff]
    %v40 = vld [vmem:[#allocation6 + $0x8] sm:$0xff]
    %v41 = vadd.f32 %v39, %v40
    %42 = vadd.xlane.f32.xlu0 %v41
    %v43 = vpop.xlane.xlu0 %42
    %v44 = vmul.f32 %v39, %v39
    %v45 = vmul.f32 %v40, %v40
    %v46 = vadd.f32 %v44, %v45
    %47 = vadd.xlane.f32.xlu0 %v46
    %v48 = vpop.xlane.xlu0 %47
    %v49 = vmul.f32 %v43, 0.00390625
    %v50 = vmul.f32 %v43, %v49
    %v51 = vsub.f32 %v48, %v50
    %v52 = vmul.f32 %v51, 0.003921569
    %v53 = vadd.f32 %v52, 1e-05
    %v54 = vrsqrt.pop %v53
    %v55 = vmul.f32 %v54, %v53
    %v56 = vmul.f32 %v55, %v54
    %v57 = vmul.f32 0.5, %v56
    %v58 = vsub.f32 1.5, %v57
    %v59 = vmul.f32 %v54, %v58
    %vm60 = vweird.f32 %v53
    %vm61 = vweird.f32 %v54
    %vm62 = vmor %vm60, %vm61
    %v63 = vsel %vm62, %v54, %v59
    %s64 = sld [smem:[#allocation2]]
    %s65 = sld [smem:[#allocation2 + $0x1]]
    %v66 = vstv %s64
    %v67 = vmul.f32 %v63, %v66
    %v68 = vmul.f32 %v49, %v67
    %v69 = vstv %s65
    %v70 = vsub.f32 %v69, %v68
    %v71 = vmul.f32 %v39, %v67
    %v72 = vmul.f32 %v40, %v67
    %v73 = vadd.f32 %v71, %v70
    %v74 = vadd.f32 %v72, %v70
    %75 = vst [vmem:[#allocation7] sm:$0xff] %v73
    %76 = vst [vmem:[#allocation7 + $0x8] sm:$0xff] %v74
    // Predicated region
    $region18: #{tpu_custom_call.1} parent=1 // pred_check
      _
    $region19: #{tpu_custom_call.1} parent=1 // pred_check_branch
      %78 = sbr.rel (0) target = $region21
    $region20: #{tpu_custom_call.1} parent=1 // pred_region
      %80 = vsyncadd [#allocation4], 0
      %s82 = sshll.u32 [#allocation7], 4
      %s83 = int_to_ptr.vmem [resolvable:$true] %s82
      %s84 = sshll.u32 %s2, 4
      %s85 = int_to_ptr.hbm [resolvable:$true] %s84
      %87 = dma.vmem_to_hbm [thread:$0]  %s83, 256, %s85, [#allocation4]
    $region21: #{tpu_custom_call.1} parent=1 // pred_fallthru
      _
    // Predicated region
    $region22: #{tpu_custom_call.1} parent=1 // pred_check
      _
    $region23: #{tpu_custom_call.1} parent=1 // pred_check_branch
      %89 = sbr.rel (0) target = $region25
    $region24: #{tpu_custom_call.1} parent=1 // pred_region
      %91 = dma.done [#allocation4], 256
    $region25: #{tpu_custom_call.1} parent=1 // pred_fallthru
      _
    %92 = vsyncpa [#allocation3], 1
    %93 = vsyncpa [#allocation4], 1
    %94 = vsyncpa [#allocation5], 1

</llo_original>
